<compile_context>
chip_gen: v7x
topology: tpu7x:2x2x1
jax: 0.10.0
libtpu: 0.0.40
codegen_flags: <defaults>
</compile_context>

<pallas_src>
import jax
import jax.numpy as jnp
from jax.experimental import pallas as pl
from jax.experimental.pallas import tpu as pltpu


_VMEM_LIMIT_BYTES = 48 * 1024 * 1024   # > 32 MiB default, < v7x 64 MiB physical


# ------------------------------ conv path -----------------------------------
def _conv_down_kernel(xp_ref, wA_ref, wB_ref, b_ref, o_ref):
    """pad(right/bottom=1) + Conv2d(C, C, k=3, s=2) on one packed image.

    xp_ref : (1, Hq, 2*Wq, 2C)  packed padded input; element
             [0, i, r*Wq + j, s*C + c] == x_pad[2i + r, 2j + s, c]
    wA_ref : (3, 2C, TC)        per-kh weights for taps (kh,0)+(kh,1)
    wB_ref : (3,  C, TC)        per-kh weights for tap  (kh,2)
    b_ref  : (1, TC)            bias tile (f32)
    o_ref  : (1, Ho*Wo, TC)     output rows are io*Wo + jo
    """
    _, Hq, Wq2, C2 = xp_ref.shape
    Wq, C = Wq2 // 2, C2 // 2
    Ho, Wo = Hq - 1, Wq - 1
    tc = o_ref.shape[2]

    # f32 accumulator initialized with the broadcast bias (saves the epilogue
    # add).
    acc = jnp.broadcast_to(b_ref[...].astype(jnp.float32), (Ho * Wo, tc))

    # 6 tap-group matmuls.  For each kernel row kh:
    #   * taps (kh,0)+(kh,1): both column parities live in the lane dim ->
    #     one K = 2C dot,
    #   * tap (kh,2): input column 2*jo + 2 is the EVEN-parity lane half at
    #     packed column jo + 1 -> one K = C dot (no zero-padded weights).
    # The only stride-2 access (rows) sits on a leading dim -> pure addressing.
    for kh in range(3):
        i0, r = divmod(kh, 2)            # input row 2*io + kh == 2*(io+i0) + r
        c0 = r * Wq
        win = xp_ref[0, i0:i0 + Ho, c0:c0 + Wo, :]           # (Ho, Wo, 2C)
        acc = acc + jnp.dot(win.reshape(Ho * Wo, 2 * C), wA_ref[kh],
                            preferred_element_type=jnp.float32)
        win2 = xp_ref[0, i0:i0 + Ho, c0 + 1:c0 + 1 + Wo, 0:C]  # (Ho, Wo, C)
        acc = acc + jnp.dot(win2.reshape(Ho * Wo, C), wB_ref[kh],
                            preferred_element_type=jnp.float32)

    o_ref[0] = acc.astype(o_ref.dtype)


def downsample_with_conv(x_nchw, w_oihw, bias, *, compute_dtype=None):
    """Downsample(with_conv=True) forward.  NCHW in, NCHW out."""
    N, C, H, W = x_nchw.shape
    Cout = w_oihw.shape[0]
    Ho = (H - 2) // 2 + 1                # == floor((H + 1 - 3) / 2) + 1
    Wo = (W - 2) // 2 + 1
    Hq, Wq = Ho + 1, Wo + 1

    # NHWC + zero pad (the module's right/bottom pad, plus <=1 extra zero
    # row/col so the spatial dims become exactly 2*Hq x 2*Wq); one XLA copy.
    x = jnp.transpose(x_nchw, (0, 2, 3, 1))
    x = jnp.pad(x, ((0, 0), (0, 2 * Hq - H), (0, 2 * Wq - W), (0, 0)))
    # FREE reshape: pack column pairs into lanes; no parity slices in HBM.
    xp = x.reshape(N, Hq, 2 * Wq, 2 * C)

    # Weight packing matching the kernel's tap-group order.
    w_t = jnp.transpose(w_oihw, (2, 3, 1, 0))        # (kh, kw, Cin, Cout)
    wA = jnp.stack([jnp.concatenate([w_t[kh, 0], w_t[kh, 1]], axis=0)
                    for kh in range(3)], axis=0)     # (3, 2C, Cout)
    wB = w_t[:, 2]                                   # (3,  C, Cout)
    b2 = bias.reshape(1, Cout).astype(jnp.float32)

    if compute_dtype is not None:                    # e.g. jnp.bfloat16 MXU
        xp = xp.astype(compute_dtype)
        wA = wA.astype(compute_dtype)
        wB = wB.astype(compute_dtype)

    tc = min(Cout, 128)                              # 128-wide MXU output tiles
    n_oc = pl.cdiv(Cout, tc)

    out = pl.pallas_call(
        _conv_down_kernel,
        out_shape=jax.ShapeDtypeStruct((N, Ho * Wo, Cout), x_nchw.dtype),
        grid=(N, n_oc),                              # oc innermost: the input
        in_specs=[                                   # block is fetched once/image
            pl.BlockSpec((1, Hq, 2 * Wq, 2 * C), lambda n, oc: (n, 0, 0, 0)),
            pl.BlockSpec((3, 2 * C, tc), lambda n, oc: (0, 0, oc)),
            pl.BlockSpec((3, C, tc), lambda n, oc: (0, 0, oc)),
            pl.BlockSpec((1, tc), lambda n, oc: (0, oc)),
        ],
        out_specs=pl.BlockSpec((1, Ho * Wo, tc), lambda n, oc: (n, 0, oc)),
        compiler_params=pltpu.CompilerParams(
            dimension_semantics=("parallel", "parallel"),
            vmem_limit_bytes=_VMEM_LIMIT_BYTES),
    )(xp, wA, wB, b2)

    out = out.reshape(N, Ho, Wo, Cout)               # free
    return jnp.transpose(out, (0, 3, 1, 2))          # back to NCHW


# --------------------------- avg-pool path ----------------------------------
def _avgpool_kernel(xp_ref, o_ref):
    """avg_pool2d(k=2, s=2) on one column-pair-packed image.

    xp_ref : (1, Ho, 2*Wo, 2C)   element [0, i, r*Wo + j, s*C + c]
                                 == x[2i + r, 2j + s, c]
    o_ref  : (1, Ho, Wo, C)
    """
    Wo, C = o_ref.shape[2], o_ref.shape[3]
    top = xp_ref[0, :, 0:Wo, :].astype(jnp.float32)         # rows 2i
    bot = xp_ref[0, :, Wo:2 * Wo, :].astype(jnp.float32)    # rows 2i + 1
    s = top + bot                                           # (Ho, Wo, 2C)
    s = s[:, :, :C] + s[:, :, C:]                           # + column pair
    o_ref[0] = (s * 0.25).astype(o_ref.dtype)


def downsample_no_conv(x_nchw):
    """Downsample(with_conv=False) forward (floor pooling).  NCHW in/out."""
    N, C, H, W = x_nchw.shape
    Ho, Wo = H // 2, W // 2
    x = jnp.transpose(x_nchw, (0, 2, 3, 1))
    x = x[:, :2 * Ho, :2 * Wo, :]            # floor crop (no-op for even H, W)
    xp = x.reshape(N, Ho, 2 * Wo, 2 * C)     # FREE: pack row parity + col pair
    out = pl.pallas_call(
        _avgpool_kernel,
        out_shape=jax.ShapeDtypeStruct((N, Ho, Wo, C), x_nchw.dtype),
        grid=(N,),
        in_specs=[pl.BlockSpec((1, Ho, 2 * Wo, 2 * C), lambda n: (n, 0, 0, 0))],
        out_specs=pl.BlockSpec((1, Ho, Wo, C), lambda n: (n, 0, 0, 0)),
        compiler_params=pltpu.CompilerParams(
            dimension_semantics=("parallel",),
            vmem_limit_bytes=_VMEM_LIMIT_BYTES),
    )(xp)
    return jnp.transpose(out, (0, 3, 1, 2))


# -------------------------------- main ---------------------------------------
if __name__ == "__main__":
    key = jax.random.PRNGKey(0)
    k_x, k_w, k_b = jax.random.split(key, 3)

    N, C, H, W = 2, 4, 16, 16
    x = jax.random.normal(k_x, (N, C, H, W), jnp.float32)
    # Conv2d(in_channels=C, out_channels=C, kernel_size=3) params (O, I, kh, kw)
    w = jax.random.normal(k_w, (C, C, 3, 3), jnp.float32) * 0.1
    b = jax.random.normal(k_b, (C,), jnp.float32) * 0.1

    def ref_conv(xi, wi, bi):
        x_pad = jnp.pad(xi, ((0, 0), (0, 0), (0, 1), (0, 1)))
        y = jax.lax.conv_general_dilated(
            x_pad, wi, window_strides=(2, 2), padding="VALID",
            dimension_numbers=("NCHW", "OIHW", "NCHW"))
        return y + bi.reshape(1, -1, 1, 1)

    def ref_pool(xi):
        n, c, h, wd = xi.shape
        xc = xi[:, :, :h // 2 * 2, :wd // 2 * 2]
        return xc.reshape(n, c, h // 2, 2, wd // 2, 2).mean(axis=(3, 5))

    y_conv = downsample_with_conv(x, w, b)                    # with_conv=True
    y_pool = downsample_no_conv(x)                            # with_conv=False
    y_bf16 = downsample_with_conv(x, w, b, compute_dtype=jnp.bfloat16)
    jax.block_until_ready((y_conv, y_pool, y_bf16))

    assert y_conv.shape == (N, C, 8, 8) and y_pool.shape == (N, C, 8, 8)
    assert jnp.allclose(y_conv, ref_conv(x, w, b), atol=1e-4, rtol=1e-4)
    assert jnp.allclose(y_pool, ref_pool(x), atol=1e-5, rtol=1e-5)
    assert jnp.allclose(y_bf16, ref_conv(x, w, b), atol=5e-2, rtol=5e-2)

    # odd spatial dims (edge padding / floor-pool semantics)
    x_odd = jax.random.normal(k_x, (1, C, 15, 15), jnp.float32)
    y_conv_o = downsample_with_conv(x_odd, w, b)
    y_pool_o = downsample_no_conv(x_odd)
    jax.block_until_ready((y_conv_o, y_pool_o))
    assert y_conv_o.shape == (1, C, 7, 7) and y_pool_o.shape == (1, C, 7, 7)
    assert jnp.allclose(y_conv_o, ref_conv(x_odd, w, b), atol=1e-4, rtol=1e-4)
    assert jnp.allclose(y_pool_o, ref_pool(x_odd), atol=1e-5, rtol=1e-5)

    print("KERNEL_OK")
</pallas_src>

<mosaic_0001>
module attributes {stable_mosaic.version = 11 : i64} {
  func.func @_conv_down_kernel(%arg0: i32, %arg1: i32, %arg2: memref<1x9x18x8xf32, #tpu.memory_space<vmem>>, %arg3: memref<3x8x4xf32, #tpu.memory_space<vmem>>, %arg4: memref<3x4x4xf32, #tpu.memory_space<vmem>>, %arg5: memref<1x4xf32, #tpu.memory_space<vmem>>, %arg6: memref<1x64x4xf32, #tpu.memory_space<vmem>>) attributes {dimension_semantics = [#tpu.dimension_semantics<parallel>, #tpu.dimension_semantics<parallel>], iteration_bounds = array<i64: 2, 1>, scalar_prefetch = 0 : i64, scratch_operands = 0 : i64, tpu.core_type = #tpu.core_type<tc>, window_params = [{transform_indices = @transform_0, window_bounds = array<i64: 1, 9, 18, 8>}, {transform_indices = @transform_1, window_bounds = array<i64: 3, 8, 4>}, {transform_indices = @transform_2, window_bounds = array<i64: 3, 4, 4>}, {transform_indices = @transform_3, window_bounds = array<i64: 1, 4>}, {transform_indices = @transform_4, window_bounds = array<i64: 1, 64, 4>}]} {
    %c0 = arith.constant 0 : index
    %c0_0 = arith.constant 0 : index
    %0 = vector.load %arg5[%c0, %c0_0] : memref<1x4xf32, #tpu.memory_space<vmem>>, vector<1x4xf32>
    %1 = vector.shape_cast %0 : vector<1x4xf32> to vector<1x4xf32>
    %2 = vector.broadcast %1 : vector<1x4xf32> to vector<64x4xf32>
    %c0_1 = arith.constant 0 : index
    %c0_2 = arith.constant 0 : index
    %c0_3 = arith.constant 0 : index
    %c0_4 = arith.constant 0 : index
    %3 = vector.load %arg2[%c0_1, %c0_2, %c0_3, %c0_4] : memref<1x9x18x8xf32, #tpu.memory_space<vmem>>, vector<1x8x8x8xf32>
    %4 = vector.shape_cast %3 : vector<1x8x8x8xf32> to vector<8x8x8xf32>
    %5 = vector.shape_cast %4 : vector<8x8x8xf32> to vector<64x8xf32>
    %c0_5 = arith.constant 0 : index
    %c0_6 = arith.constant 0 : index
    %c0_7 = arith.constant 0 : index
    %6 = vector.load %arg3[%c0_5, %c0_6, %c0_7] : memref<3x8x4xf32, #tpu.memory_space<vmem>>, vector<1x8x4xf32>
    %7 = vector.shape_cast %6 : vector<1x8x4xf32> to vector<8x4xf32>
    %cst = arith.constant dense<0.000000e+00> : vector<64x4xf32>
    %8 = tpu.matmul %5, %7, %cst {dimension_numbers = #tpu.dot_dimension_numbers<[1], [0], [0], [1], [0, 0, 1, 1], [], []>} : vector<64x8xf32>, vector<8x4xf32>, vector<64x4xf32> -> vector<64x4xf32>
    %9 = arith.addf %2, %8 : vector<64x4xf32>
    %c0_8 = arith.constant 0 : index
    %c0_9 = arith.constant 0 : index
    %c1 = arith.constant 1 : index
    %c0_10 = arith.constant 0 : index
    %10 = vector.load %arg2[%c0_8, %c0_9, %c1, %c0_10] : memref<1x9x18x8xf32, #tpu.memory_space<vmem>>, vector<1x8x8x4xf32>
    %11 = vector.shape_cast %10 : vector<1x8x8x4xf32> to vector<8x8x4xf32>
    %12 = vector.shape_cast %11 : vector<8x8x4xf32> to vector<64x4xf32>
    %c0_11 = arith.constant 0 : index
    %c0_12 = arith.constant 0 : index
    %c0_13 = arith.constant 0 : index
    %13 = vector.load %arg4[%c0_11, %c0_12, %c0_13] : memref<3x4x4xf32, #tpu.memory_space<vmem>>, vector<1x4x4xf32>
    %14 = vector.shape_cast %13 : vector<1x4x4xf32> to vector<4x4xf32>
    %cst_14 = arith.constant dense<0.000000e+00> : vector<64x4xf32>
    %15 = tpu.matmul %12, %14, %cst_14 {dimension_numbers = #tpu.dot_dimension_numbers<[1], [0], [0], [1], [0, 0, 1, 1], [], []>} : vector<64x4xf32>, vector<4x4xf32>, vector<64x4xf32> -> vector<64x4xf32>
    %16 = arith.addf %9, %15 : vector<64x4xf32>
    %c0_15 = arith.constant 0 : index
    %c0_16 = arith.constant 0 : index
    %c9 = arith.constant 9 : index
    %c0_17 = arith.constant 0 : index
    %17 = vector.load %arg2[%c0_15, %c0_16, %c9, %c0_17] : memref<1x9x18x8xf32, #tpu.memory_space<vmem>>, vector<1x8x8x8xf32>
    %18 = vector.shape_cast %17 : vector<1x8x8x8xf32> to vector<8x8x8xf32>
    %19 = vector.shape_cast %18 : vector<8x8x8xf32> to vector<64x8xf32>
    %c1_18 = arith.constant 1 : index
    %c0_19 = arith.constant 0 : index
    %c0_20 = arith.constant 0 : index
    %20 = vector.load %arg3[%c1_18, %c0_19, %c0_20] : memref<3x8x4xf32, #tpu.memory_space<vmem>>, vector<1x8x4xf32>
    %21 = vector.shape_cast %20 : vector<1x8x4xf32> to vector<8x4xf32>
    %cst_21 = arith.constant dense<0.000000e+00> : vector<64x4xf32>
    %22 = tpu.matmul %19, %21, %cst_21 {dimension_numbers = #tpu.dot_dimension_numbers<[1], [0], [0], [1], [0, 0, 1, 1], [], []>} : vector<64x8xf32>, vector<8x4xf32>, vector<64x4xf32> -> vector<64x4xf32>
    %23 = arith.addf %16, %22 : vector<64x4xf32>
    %c0_22 = arith.constant 0 : index
    %c0_23 = arith.constant 0 : index
    %c10 = arith.constant 10 : index
    %c0_24 = arith.constant 0 : index
    %24 = vector.load %arg2[%c0_22, %c0_23, %c10, %c0_24] : memref<1x9x18x8xf32, #tpu.memory_space<vmem>>, vector<1x8x8x4xf32>
    %25 = vector.shape_cast %24 : vector<1x8x8x4xf32> to vector<8x8x4xf32>
    %26 = vector.shape_cast %25 : vector<8x8x4xf32> to vector<64x4xf32>
    %c1_25 = arith.constant 1 : index
    %c0_26 = arith.constant 0 : index
    %c0_27 = arith.constant 0 : index
    %27 = vector.load %arg4[%c1_25, %c0_26, %c0_27] : memref<3x4x4xf32, #tpu.memory_space<vmem>>, vector<1x4x4xf32>
    %28 = vector.shape_cast %27 : vector<1x4x4xf32> to vector<4x4xf32>
    %cst_28 = arith.constant dense<0.000000e+00> : vector<64x4xf32>
    %29 = tpu.matmul %26, %28, %cst_28 {dimension_numbers = #tpu.dot_dimension_numbers<[1], [0], [0], [1], [0, 0, 1, 1], [], []>} : vector<64x4xf32>, vector<4x4xf32>, vector<64x4xf32> -> vector<64x4xf32>
    %30 = arith.addf %23, %29 : vector<64x4xf32>
    %c0_29 = arith.constant 0 : index
    %c1_30 = arith.constant 1 : index
    %c0_31 = arith.constant 0 : index
    %c0_32 = arith.constant 0 : index
    %31 = vector.load %arg2[%c0_29, %c1_30, %c0_31, %c0_32] : memref<1x9x18x8xf32, #tpu.memory_space<vmem>>, vector<1x8x8x8xf32>
    %32 = vector.shape_cast %31 : vector<1x8x8x8xf32> to vector<8x8x8xf32>
    %33 = vector.shape_cast %32 : vector<8x8x8xf32> to vector<64x8xf32>
    %c2 = arith.constant 2 : index
    %c0_33 = arith.constant 0 : index
    %c0_34 = arith.constant 0 : index
    %34 = vector.load %arg3[%c2, %c0_33, %c0_34] : memref<3x8x4xf32, #tpu.memory_space<vmem>>, vector<1x8x4xf32>
    %35 = vector.shape_cast %34 : vector<1x8x4xf32> to vector<8x4xf32>
    %cst_35 = arith.constant dense<0.000000e+00> : vector<64x4xf32>
    %36 = tpu.matmul %33, %35, %cst_35 {dimension_numbers = #tpu.dot_dimension_numbers<[1], [0], [0], [1], [0, 0, 1, 1], [], []>} : vector<64x8xf32>, vector<8x4xf32>, vector<64x4xf32> -> vector<64x4xf32>
    %37 = arith.addf %30, %36 : vector<64x4xf32>
    %c0_36 = arith.constant 0 : index
    %c1_37 = arith.constant 1 : index
    %c1_38 = arith.constant 1 : index
    %c0_39 = arith.constant 0 : index
    %38 = vector.load %arg2[%c0_36, %c1_37, %c1_38, %c0_39] : memref<1x9x18x8xf32, #tpu.memory_space<vmem>>, vector<1x8x8x4xf32>
    %39 = vector.shape_cast %38 : vector<1x8x8x4xf32> to vector<8x8x4xf32>
    %40 = vector.shape_cast %39 : vector<8x8x4xf32> to vector<64x4xf32>
    %c2_40 = arith.constant 2 : index
    %c0_41 = arith.constant 0 : index
    %c0_42 = arith.constant 0 : index
    %41 = vector.load %arg4[%c2_40, %c0_41, %c0_42] : memref<3x4x4xf32, #tpu.memory_space<vmem>>, vector<1x4x4xf32>
    %42 = vector.shape_cast %41 : vector<1x4x4xf32> to vector<4x4xf32>
    %cst_43 = arith.constant dense<0.000000e+00> : vector<64x4xf32>
    %43 = tpu.matmul %40, %42, %cst_43 {dimension_numbers = #tpu.dot_dimension_numbers<[1], [0], [0], [1], [0, 0, 1, 1], [], []>} : vector<64x4xf32>, vector<4x4xf32>, vector<64x4xf32> -> vector<64x4xf32>
    %44 = arith.addf %37, %43 : vector<64x4xf32>
    %c0_44 = arith.constant 0 : index
    %c0_45 = arith.constant 0 : index
    %c0_46 = arith.constant 0 : index
    %45 = vector.load %arg6[%c0_44, %c0_45, %c0_46] : memref<1x64x4xf32, #tpu.memory_space<vmem>>, vector<1x64x4xf32>
    %46 = vector.shape_cast %45 : vector<1x64x4xf32> to vector<64x4xf32>
    %47 = vector.shape_cast %44 : vector<64x4xf32> to vector<1x64x4xf32>
    tpu.vector_store %arg6[%c0_44, %c0_45, %c0_46], %47 {strides = array<i32>} : memref<1x64x4xf32, #tpu.memory_space<vmem>>, vector<1x64x4xf32>,
    return
  }
  func.func @transform_0(%arg0: i32, %arg1: i32) -> (i32, i32, i32, i32) {
    %c0_i32 = arith.constant 0 : i32
    %c0_i32_0 = arith.constant 0 : i32
    %c0_i32_1 = arith.constant 0 : i32
    %c0_i32_2 = arith.constant 0 : i32
    return %arg0, %c0_i32, %c0_i32_0, %c0_i32_1 : i32, i32, i32, i32
  }
  func.func @transform_1(%arg0: i32, %arg1: i32) -> (i32, i32, i32) {
    %c0_i32 = arith.constant 0 : i32
    %c0_i32_0 = arith.constant 0 : i32
    %c0_i32_1 = arith.constant 0 : i32
    return %c0_i32, %c0_i32_0, %arg1 : i32, i32, i32
  }
  func.func @transform_2(%arg0: i32, %arg1: i32) -> (i32, i32, i32) {
    %c0_i32 = arith.constant 0 : i32
    %c0_i32_0 = arith.constant 0 : i32
    %c0_i32_1 = arith.constant 0 : i32
    return %c0_i32, %c0_i32_0, %arg1 : i32, i32, i32
  }
  func.func @transform_3(%arg0: i32, %arg1: i32) -> (i32, i32) {
    %c0_i32 = arith.constant 0 : i32
    %c0_i32_0 = arith.constant 0 : i32
    return %c0_i32, %arg1 : i32, i32
  }
  func.func @transform_4(%arg0: i32, %arg1: i32) -> (i32, i32, i32) {
    %c0_i32 = arith.constant 0 : i32
    %c0_i32_0 = arith.constant 0 : i32
    return %arg0, %c0_i32, %arg1 : i32, i32, i32
  }
}

</mosaic_0001>

<llo_original>
// kernel: tpu_custom_call.1
$region0: #{tpu_custom_call.1}
  #allocation0 [shape = 'u32[]', space=smem, size = 0x4, offset = 0x4, fixed_abs, tag = 'smem constant byte address 0x4 - core index']
  #allocation1 [shape = 'u32[144,128]{1,0:T(1,128)}', space=vmem, size = 0x12000, scoped, tag = 'internal scratch']
  %s0 = inlined_call_operand.vmem [shape: f32[2,9,18,8], index: 0, kind: input, shape index: {}]
  %s1 = inlined_call_operand.vmem [shape: f32[3,8,4], index: 1, kind: input, shape index: {}]
  %s2 = inlined_call_operand.vmem [shape: f32[3,4,4], index: 2, kind: input, shape index: {}]
  %s3 = inlined_call_operand.vmem [shape: f32[1,4], index: 3, kind: input, shape index: {}]
  %s4 = inlined_call_operand.vmem [shape: f32[2,64,4], index: 4, kind: output, shape index: {}]
  %s5 = sld [smem:[#allocation0]]
  $region49: #{tpu_custom_call.1} parent=0
    _
  %s7 = ssub.s32 1, %s5
  %s8 = scalar_select 0, %s7, %s5
  loop: start=0, step=1, limit=4
  $region2: #{tpu_custom_call.1} parent=0 // loop_pre_header
    _
  $region3: #{tpu_custom_call.1} parent=0 // loop_header
    %s10 = sphi 0, %s14
    %p11 = scmp.ge.s32.totalorder %s10, 4
    %s17 = sphi 0, %s29
    %s18 = sphi 0, %s25
    %s19 = sphi 0, %s17
    %s20 = sphi 0, %s18
    %s21 = sphi 0, %s19
    %s22 = sphi 0, %s20
    %s32 = sphi 0, %s34
    %s35 = sphi 0, %s32
    %s36 = sphi 0, %s35
    %s52 = sphi 0, %s36
    %s58 = sphi 0, %s60
    %s61 = sphi 0, %s58
    %s62 = sphi 0, %s61
    %s78 = sphi 0, %s62
    %s84 = sphi 0, %s86
    %s87 = sphi 0, %s84
    %s88 = sphi 0, %s87
    %s104 = sphi 0, %s88
    %s110 = sphi 0, %s112
    %s113 = sphi 0, %s110
    %s114 = sphi 0, %s113
    %s130 = sphi 0, %s114
    %s138 = sphi 0, %s140
    %s141 = sphi 0, %s138
    %s142 = sphi 0, %s141
    %s158 = sphi 0, %s142
  $region4: #{tpu_custom_call.1} parent=0 // loop_header_branch
    %13 = sbr.rel (%p11) target = $region8
  $region5: #{tpu_custom_call.1} parent=0 // loop_body
    %s15 = ssub.s32 %s10, 1
    %s16 = ssub.s32 %s10, 2
    %s23 = sadd.s32 1, %s18
    %p24 = scmp.ge.s32.totalorder %s23, 1
    %s25 = scalar_select %p24, 0, %s23
    %s26 = sadd.s32 1, %s17
    %s27 = scalar_select %p24, %s26, %s17
    %p28 = scmp.ge.s32.totalorder %s27, 2
    %s29 = scalar_select %p28, 0, %s27
    %s30 = ssub.s32 %s17, %s29
    %p31 = scmp.eq.s32.totalorder %s30, 0
    %s33 = sadd.s32 %s32, 1
    %s34 = scalar_select %p31, %s32, %s33
    %p37 = pneg %p31
    %p38 = scmp.eq.s32.totalorder %s10, 1
    %p39 = por %p37, %p38
    %p40 = scmp.ne.s32.totalorder %s32, %s35
    %p41 = scmp.eq.s32.totalorder %s10, 0
    %p42 = por %p40, %p41
    %p43 = scmp.ne.s32.totalorder %s32, %s35
    %p44 = scmp.eq.s32.totalorder %s15, 1
    %p45 = por %p43, %p44
    %p46 = scmp.ne.s32.totalorder %s35, %s36
    %p47 = scmp.eq.s32.totalorder %s15, 0
    %p48 = por %p46, %p47
    %p49 = scmp.ne.s32.totalorder %s35, %s36
    %p50 = scmp.eq.s32.totalorder %s16, 1
    %p51 = por %p49, %p50
    %p53 = scmp.ne.s32.totalorder %s36, %s52
    %p54 = scmp.eq.s32.totalorder %s16, 0
    %p55 = por %p53, %p54
    %s56 = ssub.s32 %s18, %s25
    %p57 = scmp.eq.s32.totalorder %s56, 0
    %s59 = sadd.s32 %s58, 1
    %s60 = scalar_select %p57, %s58, %s59
    %p63 = pneg %p57
    %p64 = scmp.eq.s32.totalorder %s10, 1
    %p65 = por %p63, %p64
    %p66 = scmp.ne.s32.totalorder %s58, %s61
    %p67 = scmp.eq.s32.totalorder %s10, 0
    %p68 = por %p66, %p67
    %p69 = scmp.ne.s32.totalorder %s58, %s61
    %p70 = scmp.eq.s32.totalorder %s15, 1
    %p71 = por %p69, %p70
    %p72 = scmp.ne.s32.totalorder %s61, %s62
    %p73 = scmp.eq.s32.totalorder %s15, 0
    %p74 = por %p72, %p73
    %p75 = scmp.ne.s32.totalorder %s61, %s62
    %p76 = scmp.eq.s32.totalorder %s16, 1
    %p77 = por %p75, %p76
    %p79 = scmp.ne.s32.totalorder %s62, %s78
    %p80 = scmp.eq.s32.totalorder %s16, 0
    %p81 = por %p79, %p80
    %s82 = ssub.s32 %s18, %s25
    %p83 = scmp.eq.s32.totalorder %s82, 0
    %s85 = sadd.s32 %s84, 1
    %s86 = scalar_select %p83, %s84, %s85
    %p89 = pneg %p83
    %p90 = scmp.eq.s32.totalorder %s10, 1
    %p91 = por %p89, %p90
    %p92 = scmp.ne.s32.totalorder %s84, %s87
    %p93 = scmp.eq.s32.totalorder %s10, 0
    %p94 = por %p92, %p93
    %p95 = scmp.ne.s32.totalorder %s84, %s87
    %p96 = scmp.eq.s32.totalorder %s15, 1
    %p97 = por %p95, %p96
    %p98 = scmp.ne.s32.totalorder %s87, %s88
    %p99 = scmp.eq.s32.totalorder %s15, 0
    %p100 = por %p98, %p99
    %p101 = scmp.ne.s32.totalorder %s87, %s88
    %p102 = scmp.eq.s32.totalorder %s16, 1
    %p103 = por %p101, %p102
    %p105 = scmp.ne.s32.totalorder %s88, %s104
    %p106 = scmp.eq.s32.totalorder %s16, 0
    %p107 = por %p105, %p106
    %s108 = ssub.s32 %s18, %s25
    %p109 = scmp.eq.s32.totalorder %s108, 0
    %s111 = sadd.s32 %s110, 1
    %s112 = scalar_select %p109, %s110, %s111
    %p115 = pneg %p109
    %p116 = scmp.eq.s32.totalorder %s10, 1
    %p117 = por %p115, %p116
    %p118 = scmp.ne.s32.totalorder %s110, %s113
    %p119 = scmp.eq.s32.totalorder %s10, 0
    %p120 = por %p118, %p119
    %p121 = scmp.ne.s32.totalorder %s110, %s113
    %p122 = scmp.eq.s32.totalorder %s15, 1
    %p123 = por %p121, %p122
    %p124 = scmp.ne.s32.totalorder %s113, %s114
    %p125 = scmp.eq.s32.totalorder %s15, 0
    %p126 = por %p124, %p125
    %p127 = scmp.ne.s32.totalorder %s113, %s114
    %p128 = scmp.eq.s32.totalorder %s16, 1
    %p129 = por %p127, %p128
    %p131 = scmp.ne.s32.totalorder %s114, %s130
    %p132 = scmp.eq.s32.totalorder %s16, 0
    %p133 = por %p131, %p132
    %s134 = ssub.s32 %s17, %s29
    %s135 = ssub.s32 %s18, %s25
    %s136 = sor.u32 %s134, %s135
    %p137 = scmp.eq.s32.totalorder %s136, 0
    %s139 = sadd.s32 %s138, 1
    %s140 = scalar_select %p137, %s138, %s139
    %p143 = pneg %p137
    %p144 = scmp.eq.s32.totalorder %s10, 1
    %p145 = por %p143, %p144
    %p146 = scmp.ne.s32.totalorder %s138, %s141
    %p147 = scmp.eq.s32.totalorder %s10, 0
    %p148 = por %p146, %p147
    %p149 = scmp.ne.s32.totalorder %s138, %s141
    %p150 = scmp.eq.s32.totalorder %s15, 1
    %p151 = por %p149, %p150
    %p152 = scmp.ne.s32.totalorder %s141, %s142
    %p153 = scmp.eq.s32.totalorder %s15, 0
    %p154 = por %p152, %p153
    %p155 = scmp.ne.s32.totalorder %s141, %s142
    %p156 = scmp.eq.s32.totalorder %s16, 1
    %p157 = por %p155, %p156
    %p159 = scmp.ne.s32.totalorder %s142, %s158
    %p160 = scmp.eq.s32.totalorder %s16, 0
    %p161 = por %p159, %p160
    %p162 = scmp.le.s32.totalorder 1, %s10
    %p163 = scmp.lt.s32.totalorder %s10, 3
    %p164 = pnand %p162, %p163
    %p165 = pneg %p164
    // Predicated region
    $region9: #{tpu_custom_call.1} parent=5 // pred_check
      _
    $region10: #{tpu_custom_call.1} parent=5 // pred_check_branch
      %167 = sbr.rel (%p164) target = $region12
    $region11: #{tpu_custom_call.1} parent=5 // pred_region
      %s168 = ssub.s32 %s10, 1
      // Predicated region
      $region13: #{tpu_custom_call.1} parent=11 // pred_check
        %p169 = pneg %p74
      $region14: #{tpu_custom_call.1} parent=11 // pred_check_branch
        %171 = sbr.rel (%p169) target = $region16
      $region15: #{tpu_custom_call.1} parent=11 // pred_region
        %p172 = scmp.lt.s32.totalorder %s20, 0
        %s173 = scalar_select %p172, %s20, 0
        %s174 = smul.addr %s173, 8
        %s175 = scalar_lea.vmem %s1, %s174
      $region16: #{tpu_custom_call.1} parent=11 // pred_fallthru
        _
      // Predicated region
      $region17: #{tpu_custom_call.1} parent=11 // pred_check
        %p176 = pneg %p100
      $region18: #{tpu_custom_call.1} parent=11 // pred_check_branch
        %178 = sbr.rel (%p176) target = $region20
      $region19: #{tpu_custom_call.1} parent=11 // pred_region
        %p179 = scmp.lt.s32.totalorder %s20, 0
        %s180 = scalar_select %p179, %s20, 0
        %s181 = smul.addr %s180, 4
        %s182 = scalar_lea.vmem %s2, %s181
      $region20: #{tpu_custom_call.1} parent=11 // pred_fallthru
        _
      // Predicated region
      $region21: #{tpu_custom_call.1} parent=11 // pred_check
        %p183 = pneg %p126
      $region22: #{tpu_custom_call.1} parent=11 // pred_check_branch
        %185 = sbr.rel (%p183) target = $region24
      $region23: #{tpu_custom_call.1} parent=11 // pred_region
        %p186 = scmp.lt.s32.totalorder %s20, 0
        %s187 = scalar_select %p186, %s20, 0
        %s188 = scalar_lea.vmem %s3, %s187
      $region24: #{tpu_custom_call.1} parent=11 // pred_fallthru
        _
    $region12: #{tpu_custom_call.1} parent=5 // pred_fallthru
      _
    %p189 = scmp.lt.s32.totalorder %s10, 2
    // Predicated region
    $region25: #{tpu_custom_call.1} parent=5 // pred_check
      %p190 = pneg %p189
    $region26: #{tpu_custom_call.1} parent=5 // pred_check_branch
      %192 = sbr.rel (%p190) target = $region28
    $region27: #{tpu_custom_call.1} parent=5 // pred_region
      // Predicated region
      $region29: #{tpu_custom_call.1} parent=27 // pred_check
        %p193 = pneg %p42
      $region30: #{tpu_custom_call.1} parent=27 // pred_check_branch
        %195 = sbr.rel (%p193) target = $region32
      $region31: #{tpu_custom_call.1} parent=27 // pred_region
        %p196 = scmp.lt.s32.totalorder %s17, 1
        %s197 = scalar_select %p196, %s17, 1
        %s198 = smul.addr %s197, 27
        %s199 = smul.addr %s198, 8
        %s200 = scalar_lea.vmem %s0, %s199
      $region32: #{tpu_custom_call.1} parent=27 // pred_fallthru
        _
    $region28: #{tpu_custom_call.1} parent=5 // pred_fallthru
      _
    %p201 = scmp.le.s32.totalorder 1, %s10
    %p202 = scmp.lt.s32.totalorder %s10, 3
    %p203 = pnand %p201, %p202
    %p204 = pneg %p203
    // Predicated region
    $region33: #{tpu_custom_call.1} parent=5 // pred_check
      _
    $region34: #{tpu_custom_call.1} parent=5 // pred_check_branch
      %206 = sbr.rel (%p203) target = $region36
    $region35: #{tpu_custom_call.1} parent=5 // pred_region
      %s207 = ssub.s32 %s10, 1
      %p208 = scmp.lt.s32.totalorder %s19, 1
      %s209 = scalar_select %p208, %s19, 1
      %s210 = smul.addr %s209, 27
      %s211 = smul.addr %s210, 8
      %s212 = scalar_lea.vmem %s0, %s211
      %p213 = pneg %p48
      %p214 = pneg %p45
      %p215 = scmp.lt.s32.totalorder %s20, 0
      %s216 = scalar_select %p215, %s20, 0
      %s217 = smul.addr %s216, 8
      %s218 = scalar_lea.vmem %s1, %s217
      %p219 = pneg %p74
      %p220 = pneg %p71
      %p221 = scmp.lt.s32.totalorder %s20, 0
      %s222 = scalar_select %p221, %s20, 0
      %s223 = smul.addr %s222, 4
      %s224 = scalar_lea.vmem %s2, %s223
      %p225 = pneg %p100
      %p226 = pneg %p97
      %p227 = scmp.lt.s32.totalorder %s20, 0
      %s228 = scalar_select %p227, %s20, 0
      %s229 = scalar_lea.vmem %s3, %s228
      %p230 = pneg %p126
      %p231 = pneg %p123
      %p232 = pneg %p154
      %p233 = pneg %p151
      %p234 = scmp.lt.s32.totalorder %s19, 1
      %s235 = scalar_select %p234, %s19, 1
      %p236 = scmp.lt.s32.totalorder %s20, 0
      %s237 = scalar_select %p236, %s20, 0
      %s238 = smul.addr %s235, 8
      %s239 = sadd.s32 %s237, %s238
      %s240 = smul.addr %s239, 8
      %s241 = scalar_lea.vmem %s4, %s240
      %p242 = scmp.lt.s32.totalorder %s19, 1
      %s243 = scalar_select %p242, %s19, 1
      %s244 = smul.addr %s243, 27
      %s245 = smul.addr %s244, 8
      %s246 = scalar_lea.vmem %s0, %s245
      %p247 = scmp.lt.s32.totalorder %s20, 0
      %s248 = scalar_select %p247, %s20, 0
      %s249 = smul.addr %s248, 8
      %s250 = scalar_lea.vmem %s1, %s249
      %p251 = scmp.lt.s32.totalorder %s20, 0
      %s252 = scalar_select %p251, %s20, 0
      %s253 = smul.addr %s252, 4
      %s254 = scalar_lea.vmem %s2, %s253
      %p255 = scmp.lt.s32.totalorder %s20, 0
      %s256 = scalar_select %p255, %s20, 0
      %s257 = scalar_lea.vmem %s3, %s256
      %p258 = scmp.lt.s32.totalorder %s19, 1
      %s259 = scalar_select %p258, %s19, 1
      %p260 = scmp.lt.s32.totalorder %s20, 0
      %s261 = scalar_select %p260, %s20, 0
      %s262 = smul.addr %s259, 8
      %s263 = sadd.s32 %s261, %s262
      %s264 = smul.addr %s263, 8
      %s265 = scalar_lea.vmem %s4, %s264
      %v266 = vld [vmem:[%s257] sm:$0x1]
      %v268 = vlaneseq
      %v269 = vshrl.u32 %v268, 7
      %v270 = vsub.s32 0, %v269
      %v271 = vrot.slane %v266, %v270
      %v273 = vld [vmem:[%s246] sm:$0xff]
      %v274 = vld [vmem:[%s246 + $0x18] sm:$0xff]
      %v275 = vld [vmem:[%s246 + $0x30] sm:$0xff]
      %v276 = vld [vmem:[%s246 + $0x48] sm:$0xff]
      %v277 = vld [vmem:[%s246 + $0x60] sm:$0xff]
      %v278 = vld [vmem:[%s246 + $0x78] sm:$0xff]
      %v279 = vld [vmem:[%s246 + $0x90] sm:$0xff]
      %v280 = vld [vmem:[%s246 + $0xa8] sm:$0xff]
      %v281 = vld [vmem:[%s250] sm:$0xff]
      %vm282 = vcmask 64512
      %v284 = vsel %vm282, %v273, 0
      %v287 = vsel %vm282, %v274, 0
      %v290 = vsel %vm282, %v275, 0
      %v293 = vsel %vm282, %v276, 0
      %v296 = vsel %vm282, %v277, 0
      %v299 = vsel %vm282, %v278, 0
      %v302 = vsel %vm282, %v279, 0
      %v305 = vsel %vm282, %v280, 0
      %307 = vmatprep.subr.mxu0 0.0
      %308 = vmatpush1.msra.mxu0 %v281
      %309 = vmatprep.subr.mxu0 0.0
      %310 = vmatpush1.msra.mxu0 0.0
      %311 = vmatprep.subr.mxu0 0.0
      %312 = vmatpush1.msra.mxu0 0.0
      %313 = vmatprep.subr.mxu0 0.0
      %314 = vmatpush1.msra.mxu0 0.0
      %315 = vmatprep.subr.mxu0 0.0
      %316 = vmatpush1.msra.mxu0 0.0
      %317 = vmatprep.subr.mxu0 0.0
      %318 = vmatpush1.msra.mxu0 0.0
      %319 = vmatprep.subr.mxu0 0.0
      %320 = vmatpush1.msra.mxu0 0.0
      %321 = vmatprep.subr.mxu0 0.0
      %322 = vmatpush1.msra.mxu0 0.0
      %323 = vmatprep.subr.mxu0 0.0
      %324 = vmatpush1.msra.mxu0 0.0
      %325 = vmatprep.subr.mxu0 0.0
      %326 = vmatpush1.msra.mxu0 0.0
      %327 = vmatprep.subr.mxu0 0.0
      %328 = vmatpush1.msra.mxu0 0.0
      %329 = vmatprep.subr.mxu0 0.0
      %330 = vmatpush1.msra.mxu0 0.0
      %331 = vmatprep.subr.mxu0 0.0
      %332 = vmatpush1.msra.mxu0 0.0
      %333 = vmatprep.subr.mxu0 0.0
      %334 = vmatpush1.msra.mxu0 0.0
      %335 = vmatprep.subr.mxu0 0.0
      %336 = vmatpush1.msra.mxu0 0.0
      %337 = vmatprep.subr.mxu0 0.0
      %338 = vmatpush1.msra.mxu0 0.0
      %339 = vmatprep.subr.mxu0 0.0
      %340 = vmatpush1.msra.mxu0 0.0
      %341 = vmatprep.subr.mxu0 0.0
      %342 = vmatpush1.msra.mxu0 0.0
      %343 = vmatprep.subr.mxu0 0.0
      %344 = vmatpush1.msra.mxu0 0.0
      %345 = vmatprep.subr.mxu0 0.0
      %346 = vmatpush1.msra.mxu0 0.0
      %347 = vmatprep.subr.mxu0 0.0
      %348 = vmatpush1.msra.mxu0 0.0
      %349 = vmatprep.subr.mxu0 0.0
      %350 = vmatpush1.msra.mxu0 0.0
      %351 = vmatprep.subr.mxu0 0.0
      %352 = vmatpush1.msra.mxu0 0.0
      %353 = vmatprep.subr.mxu0 0.0
      %354 = vmatpush1.msra.mxu0 0.0
      %355 = vmatprep.subr.mxu0 0.0
      %356 = vmatpush1.msra.mxu0 0.0
      %357 = vmatprep.subr.mxu0 0.0
      %358 = vmatpush1.msra.mxu0 0.0
      %359 = vmatprep.subr.mxu0 0.0
      %360 = vmatpush1.msra.mxu0 0.0
      %361 = vmatprep.subr.mxu0 0.0
      %362 = vmatpush1.msra.mxu0 0.0
      %363 = vmatprep.subr.mxu0 0.0
      %364 = vmatpush1.msra.mxu0 0.0
      %365 = vmatprep.subr.mxu0 0.0
      %366 = vmatpush1.msra.mxu0 0.0
      %367 = vmatprep.subr.mxu0 0.0
      %368 = vmatpush1.msra.mxu0 0.0
      %369 = vmatprep.subr.mxu0 0.0
      %370 = vmatpush1.msra.mxu0 0.0
      %371 = vmatprep.mubr.f32.mxu0 0.0
      %372 = vmatmul.mubr.f32.gmra.mrb[0].mxu0 %v284
      %v373 = vpop.f32.mrb[0].mxu0
      %v374 = vadd.f32 0.0, %v373
      %v375 = vpop.f32.mrb[0].mxu0
      %376 = vmatprep.mubr.f32.mxu0 0.0
      %377 = vmatmul.mubr.f32.gmra.mrb[0].mxu0 %v287
      %v378 = vpop.f32.mrb[0].mxu0
      %v379 = vadd.f32 0.0, %v378
      %v380 = vpop.f32.mrb[0].mxu0
      %381 = vmatprep.mubr.f32.mxu0 0.0
      %382 = vmatmul.mubr.f32.gmra.mrb[0].mxu0 %v290
      %v383 = vpop.f32.mrb[0].mxu0
      %v384 = vadd.f32 0.0, %v383
      %v385 = vpop.f32.mrb[0].mxu0
      %386 = vmatprep.mubr.f32.mxu0 0.0
      %387 = vmatmul.mubr.f32.gmra.mrb[0].mxu0 %v293
      %v388 = vpop.f32.mrb[0].mxu0
      %v389 = vadd.f32 0.0, %v388
      %v390 = vpop.f32.mrb[0].mxu0
      %391 = vmatprep.mubr.f32.mxu0 0.0
      %392 = vmatmul.mubr.f32.gmra.mrb[0].mxu0 %v296
      %v393 = vpop.f32.mrb[0].mxu0
      %v394 = vadd.f32 0.0, %v393
      %v395 = vpop.f32.mrb[0].mxu0
      %396 = vmatprep.mubr.f32.mxu0 0.0
      %397 = vmatmul.mubr.f32.gmra.mrb[0].mxu0 %v299
      %v398 = vpop.f32.mrb[0].mxu0
      %v399 = vadd.f32 0.0, %v398
      %v400 = vpop.f32.mrb[0].mxu0
      %401 = vmatprep.mubr.f32.mxu0 0.0
      %402 = vmatmul.mubr.f32.gmra.mrb[0].mxu0 %v302
      %v403 = vpop.f32.mrb[0].mxu0
      %v404 = vadd.f32 0.0, %v403
      %v405 = vpop.f32.mrb[0].mxu0
      %406 = vmatprep.mubr.f32.mxu0 0.0
      %407 = vmatmul.mubr.f32.gmra.mrb[0].mxu0 %v305
      %v408 = vpop.f32.mrb[0].mxu0
      %v409 = vadd.f32 0.0, %v408
      %v410 = vpop.f32.mrb[0].mxu0
      %411 = vdwg.mxu0
      %v412 = vadd.f32 %v271, %v374
      %v413 = vadd.f32 %v271, %v379
      %v414 = vadd.f32 %v271, %v384
      %v415 = vadd.f32 %v271, %v389
      %v416 = vadd.f32 %v271, %v394
      %v417 = vadd.f32 %v271, %v399
      %v418 = vadd.f32 %v271, %v404
      %v419 = vadd.f32 %v271, %v409
      %v420 = vld [vmem:[%s246 + $0x1] sm:$0xff]
      %v421 = vld [vmem:[%s246 + $0x19] sm:$0xff]
      %v422 = vld [vmem:[%s246 + $0x31] sm:$0xff]
      %v423 = vld [vmem:[%s246 + $0x49] sm:$0xff]
      %v424 = vld [vmem:[%s246 + $0x61] sm:$0xff]
      %v425 = vld [vmem:[%s246 + $0x79] sm:$0xff]
      %v426 = vld [vmem:[%s246 + $0x91] sm:$0xff]
      %v427 = vld [vmem:[%s246 + $0xa9] sm:$0xff]
      %v428 = vld [vmem:[%s254] sm:$0xf]
      %vm429 = vcmask 31744
      %v431 = vsel %vm429, %v420, 0
      %v434 = vsel %vm429, %v421, 0
      %v437 = vsel %vm429, %v422, 0
      %v440 = vsel %vm429, %v423, 0
      %v443 = vsel %vm429, %v424, 0
      %v446 = vsel %vm429, %v425, 0
      %v449 = vsel %vm429, %v426, 0
      %v452 = vsel %vm429, %v427, 0
      %vm454 = vcmask 1043456
      %v456 = vsel %vm454, %v428, 0
      %458 = vmatprep.subr.mxu0 0.0
      %459 = vmatpush1.msra.mxu0 %v456
      %460 = vmatprep.subr.mxu0 0.0
      %461 = vmatpush1.msra.mxu0 0.0
      %462 = vmatprep.subr.mxu0 0.0
      %463 = vmatpush1.msra.mxu0 0.0
      %464 = vmatprep.subr.mxu0 0.0
      %465 = vmatpush1.msra.mxu0 0.0
      %466 = vmatprep.subr.mxu0 0.0
      %467 = vmatpush1.msra.mxu0 0.0
      %468 = vmatprep.subr.mxu0 0.0
      %469 = vmatpush1.msra.mxu0 0.0
      %470 = vmatprep.subr.mxu0 0.0
      %471 = vmatpush1.msra.mxu0 0.0
      %472 = vmatprep.subr.mxu0 0.0
      %473 = vmatpush1.msra.mxu0 0.0
      %474 = vmatprep.subr.mxu0 0.0
      %475 = vmatpush1.msra.mxu0 0.0
      %476 = vmatprep.subr.mxu0 0.0
      %477 = vmatpush1.msra.mxu0 0.0
      %478 = vmatprep.subr.mxu0 0.0
      %479 = vmatpush1.msra.mxu0 0.0
      %480 = vmatprep.subr.mxu0 0.0
      %481 = vmatpush1.msra.mxu0 0.0
      %482 = vmatprep.subr.mxu0 0.0
      %483 = vmatpush1.msra.mxu0 0.0
      %484 = vmatprep.subr.mxu0 0.0
      %485 = vmatpush1.msra.mxu0 0.0
      %486 = vmatprep.subr.mxu0 0.0
      %487 = vmatpush1.msra.mxu0 0.0
      %488 = vmatprep.subr.mxu0 0.0
      %489 = vmatpush1.msra.mxu0 0.0
      %490 = vmatprep.subr.mxu0 0.0
      %491 = vmatpush1.msra.mxu0 0.0
      %492 = vmatprep.subr.mxu0 0.0
      %493 = vmatpush1.msra.mxu0 0.0
      %494 = vmatprep.subr.mxu0 0.0
      %495 = vmatpush1.msra.mxu0 0.0
      %496 = vmatprep.subr.mxu0 0.0
      %497 = vmatpush1.msra.mxu0 0.0
      %498 = vmatprep.subr.mxu0 0.0
      %499 = vmatpush1.msra.mxu0 0.0
      %500 = vmatprep.subr.mxu0 0.0
      %501 = vmatpush1.msra.mxu0 0.0
      %502 = vmatprep.subr.mxu0 0.0
      %503 = vmatpush1.msra.mxu0 0.0
      %504 = vmatprep.subr.mxu0 0.0
      %505 = vmatpush1.msra.mxu0 0.0
      %506 = vmatprep.subr.mxu0 0.0
      %507 = vmatpush1.msra.mxu0 0.0
      %508 = vmatprep.subr.mxu0 0.0
      %509 = vmatpush1.msra.mxu0 0.0
      %510 = vmatprep.subr.mxu0 0.0
      %511 = vmatpush1.msra.mxu0 0.0
      %512 = vmatprep.subr.mxu0 0.0
      %513 = vmatpush1.msra.mxu0 0.0
      %514 = vmatprep.subr.mxu0 0.0
      %515 = vmatpush1.msra.mxu0 0.0
      %516 = vmatprep.subr.mxu0 0.0
      %517 = vmatpush1.msra.mxu0 0.0
      %518 = vmatprep.subr.mxu0 0.0
      %519 = vmatpush1.msra.mxu0 0.0
      %520 = vmatprep.subr.mxu0 0.0
      %521 = vmatpush1.msra.mxu0 0.0
      %522 = vmatprep.mubr.f32.mxu0 0.0
      %523 = vmatmul.mubr.f32.gmra.mrb[0].mxu0 %v431
      %v524 = vpop.f32.mrb[0].mxu0
      %v525 = vadd.f32 0.0, %v524
      %v526 = vpop.f32.mrb[0].mxu0
      %527 = vmatprep.mubr.f32.mxu0 0.0
      %528 = vmatmul.mubr.f32.gmra.mrb[0].mxu0 %v434
      %v529 = vpop.f32.mrb[0].mxu0
      %v530 = vadd.f32 0.0, %v529
      %v531 = vpop.f32.mrb[0].mxu0
      %532 = vmatprep.mubr.f32.mxu0 0.0
      %533 = vmatmul.mubr.f32.gmra.mrb[0].mxu0 %v437
      %v534 = vpop.f32.mrb[0].mxu0
      %v535 = vadd.f32 0.0, %v534
      %v536 = vpop.f32.mrb[0].mxu0
      %537 = vmatprep.mubr.f32.mxu0 0.0
      %538 = vmatmul.mubr.f32.gmra.mrb[0].mxu0 %v440
      %v539 = vpop.f32.mrb[0].mxu0
      %v540 = vadd.f32 0.0, %v539
      %v541 = vpop.f32.mrb[0].mxu0
      %542 = vmatprep.mubr.f32.mxu0 0.0
      %543 = vmatmul.mubr.f32.gmra.mrb[0].mxu0 %v443
      %v544 = vpop.f32.mrb[0].mxu0
      %v545 = vadd.f32 0.0, %v544
      %v546 = vpop.f32.mrb[0].mxu0
      %547 = vmatprep.mubr.f32.mxu0 0.0
      %548 = vmatmul.mubr.f32.gmra.mrb[0].mxu0 %v446
      %v549 = vpop.f32.mrb[0].mxu0
      %v550 = vadd.f32 0.0, %v549
      %v551 = vpop.f32.mrb[0].mxu0
      %552 = vmatprep.mubr.f32.mxu0 0.0
      %553 = vmatmul.mubr.f32.gmra.mrb[0].mxu0 %v449
      %v554 = vpop.f32.mrb[0].mxu0
      %v555 = vadd.f32 0.0, %v554
      %v556 = vpop.f32.mrb[0].mxu0
      %557 = vmatprep.mubr.f32.mxu0 0.0
      %558 = vmatmul.mubr.f32.gmra.mrb[0].mxu0 %v452
      %v559 = vpop.f32.mrb[0].mxu0
      %v560 = vadd.f32 0.0, %v559
      %v561 = vpop.f32.mrb[0].mxu0
      %562 = vdwg.mxu0
      %v563 = vadd.f32 %v412, %v525
      %v564 = vadd.f32 %v413, %v530
      %v565 = vadd.f32 %v414, %v535
      %v566 = vadd.f32 %v415, %v540
      %v567 = vadd.f32 %v416, %v545
      %v568 = vadd.f32 %v417, %v550
      %v569 = vadd.f32 %v418, %v555
      %v570 = vadd.f32 %v419, %v560
      %v571 = vld [vmem:[%s246 + $0x9] sm:$0xff]
      %v572 = vld [vmem:[%s246 + $0x21] sm:$0xff]
      %v573 = vld [vmem:[%s246 + $0x39] sm:$0xff]
      %v574 = vld [vmem:[%s246 + $0x51] sm:$0xff]
      %v575 = vld [vmem:[%s246 + $0x69] sm:$0xff]
      %v576 = vld [vmem:[%s246 + $0x81] sm:$0xff]
      %v577 = vld [vmem:[%s246 + $0x99] sm:$0xff]
      %v578 = vld [vmem:[%s246 + $0xb1] sm:$0xff]
      %s579 = scalar_lea.vmem %s250, 8
      %v580 = vld [vmem:[%s579] sm:$0xff]
      %v582 = vsel %vm282, %v571, 0
      %v585 = vsel %vm282, %v572, 0
      %v588 = vsel %vm282, %v573, 0
      %v591 = vsel %vm282, %v574, 0
      %v594 = vsel %vm282, %v575, 0
      %v597 = vsel %vm282, %v576, 0
      %v600 = vsel %vm282, %v577, 0
      %v603 = vsel %vm282, %v578, 0
      %605 = vmatprep.subr.mxu0 0.0
      %606 = vmatpush1.msra.mxu0 %v580
      %607 = vmatprep.subr.mxu0 0.0
      %608 = vmatpush1.msra.mxu0 0.0
      %609 = vmatprep.subr.mxu0 0.0
      %610 = vmatpush1.msra.mxu0 0.0
      %611 = vmatprep.subr.mxu0 0.0
      %612 = vmatpush1.msra.mxu0 0.0
      %613 = vmatprep.subr.mxu0 0.0
      %614 = vmatpush1.msra.mxu0 0.0
      %615 = vmatprep.subr.mxu0 0.0
      %616 = vmatpush1.msra.mxu0 0.0
      %617 = vmatprep.subr.mxu0 0.0
      %618 = vmatpush1.msra.mxu0 0.0
      %619 = vmatprep.subr.mxu0 0.0
      %620 = vmatpush1.msra.mxu0 0.0
      %621 = vmatprep.subr.mxu0 0.0
      %622 = vmatpush1.msra.mxu0 0.0
      %623 = vmatprep.subr.mxu0 0.0
      %624 = vmatpush1.msra.mxu0 0.0
      %625 = vmatprep.subr.mxu0 0.0
      %626 = vmatpush1.msra.mxu0 0.0
      %627 = vmatprep.subr.mxu0 0.0
      %628 = vmatpush1.msra.mxu0 0.0
      %629 = vmatprep.subr.mxu0 0.0
      %630 = vmatpush1.msra.mxu0 0.0
      %631 = vmatprep.subr.mxu0 0.0
      %632 = vmatpush1.msra.mxu0 0.0
      %633 = vmatprep.subr.mxu0 0.0
      %634 = vmatpush1.msra.mxu0 0.0
      %635 = vmatprep.subr.mxu0 0.0
      %636 = vmatpush1.msra.mxu0 0.0
      %637 = vmatprep.subr.mxu0 0.0
      %638 = vmatpush1.msra.mxu0 0.0
      %639 = vmatprep.subr.mxu0 0.0
      %640 = vmatpush1.msra.mxu0 0.0
      %641 = vmatprep.subr.mxu0 0.0
      %642 = vmatpush1.msra.mxu0 0.0
      %643 = vmatprep.subr.mxu0 0.0
      %644 = vmatpush1.msra.mxu0 0.0
      %645 = vmatprep.subr.mxu0 0.0
      %646 = vmatpush1.msra.mxu0 0.0
      %647 = vmatprep.subr.mxu0 0.0
      %648 = vmatpush1.msra.mxu0 0.0
      %649 = vmatprep.subr.mxu0 0.0
      %650 = vmatpush1.msra.mxu0 0.0
      %651 = vmatprep.subr.mxu0 0.0
      %652 = vmatpush1.msra.mxu0 0.0
      %653 = vmatprep.subr.mxu0 0.0
      %654 = vmatpush1.msra.mxu0 0.0
      %655 = vmatprep.subr.mxu0 0.0
      %656 = vmatpush1.msra.mxu0 0.0
      %657 = vmatprep.subr.mxu0 0.0
      %658 = vmatpush1.msra.mxu0 0.0
      %659 = vmatprep.subr.mxu0 0.0
      %660 = vmatpush1.msra.mxu0 0.0
      %661 = vmatprep.subr.mxu0 0.0
      %662 = vmatpush1.msra.mxu0 0.0
      %663 = vmatprep.subr.mxu0 0.0
      %664 = vmatpush1.msra.mxu0 0.0
      %665 = vmatprep.subr.mxu0 0.0
      %666 = vmatpush1.msra.mxu0 0.0
      %667 = vmatprep.subr.mxu0 0.0
      %668 = vmatpush1.msra.mxu0 0.0
      %669 = vmatprep.mubr.f32.mxu0 0.0
      %670 = vmatmul.mubr.f32.gmra.mrb[0].mxu0 %v582
      %v671 = vpop.f32.mrb[0].mxu0
      %v672 = vadd.f32 0.0, %v671
      %v673 = vpop.f32.mrb[0].mxu0
      %674 = vmatprep.mubr.f32.mxu0 0.0
      %675 = vmatmul.mubr.f32.gmra.mrb[0].mxu0 %v585
      %v676 = vpop.f32.mrb[0].mxu0
      %v677 = vadd.f32 0.0, %v676
      %v678 = vpop.f32.mrb[0].mxu0
      %679 = vmatprep.mubr.f32.mxu0 0.0
      %680 = vmatmul.mubr.f32.gmra.mrb[0].mxu0 %v588
      %v681 = vpop.f32.mrb[0].mxu0
      %v682 = vadd.f32 0.0, %v681
      %v683 = vpop.f32.mrb[0].mxu0
      %684 = vmatprep.mubr.f32.mxu0 0.0
      %685 = vmatmul.mubr.f32.gmra.mrb[0].mxu0 %v591
      %v686 = vpop.f32.mrb[0].mxu0
      %v687 = vadd.f32 0.0, %v686
      %v688 = vpop.f32.mrb[0].mxu0
      %689 = vmatprep.mubr.f32.mxu0 0.0
      %690 = vmatmul.mubr.f32.gmra.mrb[0].mxu0 %v594
      %v691 = vpop.f32.mrb[0].mxu0
      %v692 = vadd.f32 0.0, %v691
      %v693 = vpop.f32.mrb[0].mxu0
      %694 = vmatprep.mubr.f32.mxu0 0.0
      %695 = vmatmul.mubr.f32.gmra.mrb[0].mxu0 %v597
      %v696 = vpop.f32.mrb[0].mxu0
      %v697 = vadd.f32 0.0, %v696
      %v698 = vpop.f32.mrb[0].mxu0
      %699 = vmatprep.mubr.f32.mxu0 0.0
      %700 = vmatmul.mubr.f32.gmra.mrb[0].mxu0 %v600
      %v701 = vpop.f32.mrb[0].mxu0
      %v702 = vadd.f32 0.0, %v701
      %v703 = vpop.f32.mrb[0].mxu0
      %704 = vmatprep.mubr.f32.mxu0 0.0
      %705 = vmatmul.mubr.f32.gmra.mrb[0].mxu0 %v603
      %v706 = vpop.f32.mrb[0].mxu0
      %v707 = vadd.f32 0.0, %v706
      %v708 = vpop.f32.mrb[0].mxu0
      %709 = vdwg.mxu0
      %v710 = vadd.f32 %v563, %v672
      %v711 = vadd.f32 %v564, %v677
      %v712 = vadd.f32 %v565, %v682
      %v713 = vadd.f32 %v566, %v687
      %v714 = vadd.f32 %v567, %v692
      %v715 = vadd.f32 %v568, %v697
      %v716 = vadd.f32 %v569, %v702
      %v717 = vadd.f32 %v570, %v707
      %v718 = vld [vmem:[%s246 + $0xa] sm:$0xff]
      %v719 = vld [vmem:[%s246 + $0x22] sm:$0xff]
      %v720 = vld [vmem:[%s246 + $0x3a] sm:$0xff]
      %v721 = vld [vmem:[%s246 + $0x52] sm:$0xff]
      %v722 = vld [vmem:[%s246 + $0x6a] sm:$0xff]
      %v723 = vld [vmem:[%s246 + $0x82] sm:$0xff]
      %v724 = vld [vmem:[%s246 + $0x9a] sm:$0xff]
      %v725 = vld [vmem:[%s246 + $0xb2] sm:$0xff]
      %s726 = scalar_lea.vmem %s254, 4
      %v727 = vld [vmem:[%s726] sm:$0xf]
      %v729 = vsel %vm429, %v718, 0
      %v732 = vsel %vm429, %v719, 0
      %v735 = vsel %vm429, %v720, 0
      %v738 = vsel %vm429, %v721, 0
      %v741 = vsel %vm429, %v722, 0
      %v744 = vsel %vm429, %v723, 0
      %v747 = vsel %vm429, %v724, 0
      %v750 = vsel %vm429, %v725, 0
      %v753 = vsel %vm454, %v727, 0
      %755 = vmatprep.subr.mxu0 0.0
      %756 = vmatpush1.msra.mxu0 %v753
      %757 = vmatprep.subr.mxu0 0.0
      %758 = vmatpush1.msra.mxu0 0.0
      %759 = vmatprep.subr.mxu0 0.0
      %760 = vmatpush1.msra.mxu0 0.0
      %761 = vmatprep.subr.mxu0 0.0
      %762 = vmatpush1.msra.mxu0 0.0
      %763 = vmatprep.subr.mxu0 0.0
      %764 = vmatpush1.msra.mxu0 0.0
      %765 = vmatprep.subr.mxu0 0.0
      %766 = vmatpush1.msra.mxu0 0.0
      %767 = vmatprep.subr.mxu0 0.0
      %768 = vmatpush1.msra.mxu0 0.0
      %769 = vmatprep.subr.mxu0 0.0
      %770 = vmatpush1.msra.mxu0 0.0
      %771 = vmatprep.subr.mxu0 0.0
      %772 = vmatpush1.msra.mxu0 0.0
      %773 = vmatprep.subr.mxu0 0.0
      %774 = vmatpush1.msra.mxu0 0.0
      %775 = vmatprep.subr.mxu0 0.0
      %776 = vmatpush1.msra.mxu0 0.0
      %777 = vmatprep.subr.mxu0 0.0
      %778 = vmatpush1.msra.mxu0 0.0
      %779 = vmatprep.subr.mxu0 0.0
      %780 = vmatpush1.msra.mxu0 0.0
      %781 = vmatprep.subr.mxu0 0.0
      %782 = vmatpush1.msra.mxu0 0.0
      %783 = vmatprep.subr.mxu0 0.0
      %784 = vmatpush1.msra.mxu0 0.0
      %785 = vmatprep.subr.mxu0 0.0
      %786 = vmatpush1.msra.mxu0 0.0
      %787 = vmatprep.subr.mxu0 0.0
      %788 = vmatpush1.msra.mxu0 0.0
      %789 = vmatprep.subr.mxu0 0.0
      %790 = vmatpush1.msra.mxu0 0.0
      %791 = vmatprep.subr.mxu0 0.0
      %792 = vmatpush1.msra.mxu0 0.0
      %793 = vmatprep.subr.mxu0 0.0
      %794 = vmatpush1.msra.mxu0 0.0
      %795 = vmatprep.subr.mxu0 0.0
      %796 = vmatpush1.msra.mxu0 0.0
      %797 = vmatprep.subr.mxu0 0.0
      %798 = vmatpush1.msra.mxu0 0.0
      %799 = vmatprep.subr.mxu0 0.0
      %800 = vmatpush1.msra.mxu0 0.0
      %801 = vmatprep.subr.mxu0 0.0
      %802 = vmatpush1.msra.mxu0 0.0
      %803 = vmatprep.subr.mxu0 0.0
      %804 = vmatpush1.msra.mxu0 0.0
      %805 = vmatprep.subr.mxu0 0.0
      %806 = vmatpush1.msra.mxu0 0.0
      %807 = vmatprep.subr.mxu0 0.0
      %808 = vmatpush1.msra.mxu0 0.0
      %809 = vmatprep.subr.mxu0 0.0
      %810 = vmatpush1.msra.mxu0 0.0
      %811 = vmatprep.subr.mxu0 0.0
      %812 = vmatpush1.msra.mxu0 0.0
      %813 = vmatprep.subr.mxu0 0.0
      %814 = vmatpush1.msra.mxu0 0.0
      %815 = vmatprep.subr.mxu0 0.0
      %816 = vmatpush1.msra.mxu0 0.0
      %817 = vmatprep.subr.mxu0 0.0
      %818 = vmatpush1.msra.mxu0 0.0
      %819 = vmatprep.mubr.f32.mxu0 0.0
      %820 = vmatmul.mubr.f32.gmra.mrb[0].mxu0 %v729
      %v821 = vpop.f32.mrb[0].mxu0
      %v822 = vadd.f32 0.0, %v821
      %v823 = vpop.f32.mrb[0].mxu0
      %824 = vmatprep.mubr.f32.mxu0 0.0
      %825 = vmatmul.mubr.f32.gmra.mrb[0].mxu0 %v732
      %v826 = vpop.f32.mrb[0].mxu0
      %v827 = vadd.f32 0.0, %v826
      %v828 = vpop.f32.mrb[0].mxu0
      %829 = vmatprep.mubr.f32.mxu0 0.0
      %830 = vmatmul.mubr.f32.gmra.mrb[0].mxu0 %v735
      %v831 = vpop.f32.mrb[0].mxu0
      %v832 = vadd.f32 0.0, %v831
      %v833 = vpop.f32.mrb[0].mxu0
      %834 = vmatprep.mubr.f32.mxu0 0.0
      %835 = vmatmul.mubr.f32.gmra.mrb[0].mxu0 %v738
      %v836 = vpop.f32.mrb[0].mxu0
      %v837 = vadd.f32 0.0, %v836
      %v838 = vpop.f32.mrb[0].mxu0
      %839 = vmatprep.mubr.f32.mxu0 0.0
      %840 = vmatmul.mubr.f32.gmra.mrb[0].mxu0 %v741
      %v841 = vpop.f32.mrb[0].mxu0
      %v842 = vadd.f32 0.0, %v841
      %v843 = vpop.f32.mrb[0].mxu0
      %844 = vmatprep.mubr.f32.mxu0 0.0
      %845 = vmatmul.mubr.f32.gmra.mrb[0].mxu0 %v744
      %v846 = vpop.f32.mrb[0].mxu0
      %v847 = vadd.f32 0.0, %v846
      %v848 = vpop.f32.mrb[0].mxu0
      %849 = vmatprep.mubr.f32.mxu0 0.0
      %850 = vmatmul.mubr.f32.gmra.mrb[0].mxu0 %v747
      %v851 = vpop.f32.mrb[0].mxu0
      %v852 = vadd.f32 0.0, %v851
      %v853 = vpop.f32.mrb[0].mxu0
      %854 = vmatprep.mubr.f32.mxu0 0.0
      %855 = vmatmul.mubr.f32.gmra.mrb[0].mxu0 %v750
      %v856 = vpop.f32.mrb[0].mxu0
      %v857 = vadd.f32 0.0, %v856
      %v858 = vpop.f32.mrb[0].mxu0
      %859 = vdwg.mxu0
      %v860 = vadd.f32 %v710, %v822
      %v861 = vadd.f32 %v711, %v827
      %v862 = vadd.f32 %v712, %v832
      %v863 = vadd.f32 %v713, %v837
      %v864 = vadd.f32 %v714, %v842
      %v865 = vadd.f32 %v715, %v847
      %v866 = vadd.f32 %v716, %v852
      %v867 = vadd.f32 %v717, %v857
      %s868 = scalar_lea.vmem %s246, 24
      %v869 = vld [vmem:[%s868] sm:$0xff]
      %v870 = vld [vmem:[%s868 + $0x18] sm:$0xff]
      %v871 = vld [vmem:[%s868 + $0x30] sm:$0xff]
      %v872 = vld [vmem:[%s868 + $0x48] sm:$0xff]
      %v873 = vld [vmem:[%s868 + $0x60] sm:$0xff]
      %v874 = vld [vmem:[%s868 + $0x78] sm:$0xff]
      %v875 = vld [vmem:[%s868 + $0x90] sm:$0xff]
      %v876 = vld [vmem:[%s868 + $0xa8] sm:$0xff]
      %s877 = scalar_lea.vmem %s250, 16
      %v878 = vld [vmem:[%s877] sm:$0xff]
      %v880 = vsel %vm282, %v869, 0
      %v883 = vsel %vm282, %v870, 0
      %v886 = vsel %vm282, %v871, 0
      %v889 = vsel %vm282, %v872, 0
      %v892 = vsel %vm282, %v873, 0
      %v895 = vsel %vm282, %v874, 0
      %v898 = vsel %vm282, %v875, 0
      %v901 = vsel %vm282, %v876, 0
      %903 = vmatprep.subr.mxu0 0.0
      %904 = vmatpush1.msra.mxu0 %v878
      %905 = vmatprep.subr.mxu0 0.0
      %906 = vmatpush1.msra.mxu0 0.0
      %907 = vmatprep.subr.mxu0 0.0
      %908 = vmatpush1.msra.mxu0 0.0
      %909 = vmatprep.subr.mxu0 0.0
      %910 = vmatpush1.msra.mxu0 0.0
      %911 = vmatprep.subr.mxu0 0.0
      %912 = vmatpush1.msra.mxu0 0.0
      %913 = vmatprep.subr.mxu0 0.0
      %914 = vmatpush1.msra.mxu0 0.0
      %915 = vmatprep.subr.mxu0 0.0
      %916 = vmatpush1.msra.mxu0 0.0
      %917 = vmatprep.subr.mxu0 0.0
      %918 = vmatpush1.msra.mxu0 0.0
      %919 = vmatprep.subr.mxu0 0.0
      %920 = vmatpush1.msra.mxu0 0.0
      %921 = vmatprep.subr.mxu0 0.0
      %922 = vmatpush1.msra.mxu0 0.0
      %923 = vmatprep.subr.mxu0 0.0
      %924 = vmatpush1.msra.mxu0 0.0
      %925 = vmatprep.subr.mxu0 0.0
      %926 = vmatpush1.msra.mxu0 0.0
      %927 = vmatprep.subr.mxu0 0.0
      %928 = vmatpush1.msra.mxu0 0.0
      %929 = vmatprep.subr.mxu0 0.0
      %930 = vmatpush1.msra.mxu0 0.0
      %931 = vmatprep.subr.mxu0 0.0
      %932 = vmatpush1.msra.mxu0 0.0
      %933 = vmatprep.subr.mxu0 0.0
      %934 = vmatpush1.msra.mxu0 0.0
      %935 = vmatprep.subr.mxu0 0.0
      %936 = vmatpush1.msra.mxu0 0.0
      %937 = vmatprep.subr.mxu0 0.0
      %938 = vmatpush1.msra.mxu0 0.0
      %939 = vmatprep.subr.mxu0 0.0
      %940 = vmatpush1.msra.mxu0 0.0
      %941 = vmatprep.subr.mxu0 0.0
      %942 = vmatpush1.msra.mxu0 0.0
      %943 = vmatprep.subr.mxu0 0.0
      %944 = vmatpush1.msra.mxu0 0.0
      %945 = vmatprep.subr.mxu0 0.0
      %946 = vmatpush1.msra.mxu0 0.0
      %947 = vmatprep.subr.mxu0 0.0
      %948 = vmatpush1.msra.mxu0 0.0
      %949 = vmatprep.subr.mxu0 0.0
      %950 = vmatpush1.msra.mxu0 0.0
      %951 = vmatprep.subr.mxu0 0.0
      %952 = vmatpush1.msra.mxu0 0.0
      %953 = vmatprep.subr.mxu0 0.0
      %954 = vmatpush1.msra.mxu0 0.0
      %955 = vmatprep.subr.mxu0 0.0
      %956 = vmatpush1.msra.mxu0 0.0
      %957 = vmatprep.subr.mxu0 0.0
      %958 = vmatpush1.msra.mxu0 0.0
      %959 = vmatprep.subr.mxu0 0.0
      %960 = vmatpush1.msra.mxu0 0.0
      %961 = vmatprep.subr.mxu0 0.0
      %962 = vmatpush1.msra.mxu0 0.0
      %963 = vmatprep.subr.mxu0 0.0
      %964 = vmatpush1.msra.mxu0 0.0
      %965 = vmatprep.subr.mxu0 0.0
      %966 = vmatpush1.msra.mxu0 0.0
      %967 = vmatprep.mubr.f32.mxu0 0.0
      %968 = vmatmul.mubr.f32.gmra.mrb[0].mxu0 %v880
      %v969 = vpop.f32.mrb[0].mxu0
      %v970 = vadd.f32 0.0, %v969
      %v971 = vpop.f32.mrb[0].mxu0
      %972 = vmatprep.mubr.f32.mxu0 0.0
      %973 = vmatmul.mubr.f32.gmra.mrb[0].mxu0 %v883
      %v974 = vpop.f32.mrb[0].mxu0
      %v975 = vadd.f32 0.0, %v974
      %v976 = vpop.f32.mrb[0].mxu0
      %977 = vmatprep.mubr.f32.mxu0 0.0
      %978 = vmatmul.mubr.f32.gmra.mrb[0].mxu0 %v886
      %v979 = vpop.f32.mrb[0].mxu0
      %v980 = vadd.f32 0.0, %v979
      %v981 = vpop.f32.mrb[0].mxu0
      %982 = vmatprep.mubr.f32.mxu0 0.0
      %983 = vmatmul.mubr.f32.gmra.mrb[0].mxu0 %v889
      %v984 = vpop.f32.mrb[0].mxu0
      %v985 = vadd.f32 0.0, %v984
      %v986 = vpop.f32.mrb[0].mxu0
      %987 = vmatprep.mubr.f32.mxu0 0.0
      %988 = vmatmul.mubr.f32.gmra.mrb[0].mxu0 %v892
      %v989 = vpop.f32.mrb[0].mxu0
      %v990 = vadd.f32 0.0, %v989
      %v991 = vpop.f32.mrb[0].mxu0
      %992 = vmatprep.mubr.f32.mxu0 0.0
      %993 = vmatmul.mubr.f32.gmra.mrb[0].mxu0 %v895
      %v994 = vpop.f32.mrb[0].mxu0
      %v995 = vadd.f32 0.0, %v994
      %v996 = vpop.f32.mrb[0].mxu0
      %997 = vmatprep.mubr.f32.mxu0 0.0
      %998 = vmatmul.mubr.f32.gmra.mrb[0].mxu0 %v898
      %v999 = vpop.f32.mrb[0].mxu0
      %v1000 = vadd.f32 0.0, %v999
      %v1001 = vpop.f32.mrb[0].mxu0
      %1002 = vmatprep.mubr.f32.mxu0 0.0
      %1003 = vmatmul.mubr.f32.gmra.mrb[0].mxu0 %v901
      %v1004 = vpop.f32.mrb[0].mxu0
      %v1005 = vadd.f32 0.0, %v1004
      %v1006 = vpop.f32.mrb[0].mxu0
      %1007 = vdwg.mxu0
      %v1008 = vadd.f32 %v860, %v970
      %v1009 = vadd.f32 %v861, %v975
      %v1010 = vadd.f32 %v862, %v980
      %v1011 = vadd.f32 %v863, %v985
      %v1012 = vadd.f32 %v864, %v990
      %v1013 = vadd.f32 %v865, %v995
      %v1014 = vadd.f32 %v866, %v1000
      %v1015 = vadd.f32 %v867, %v1005
      %v1016 = vld [vmem:[%s868 + $0x1] sm:$0xff]
      %v1017 = vld [vmem:[%s868 + $0x19] sm:$0xff]
      %v1018 = vld [vmem:[%s868 + $0x31] sm:$0xff]
      %v1019 = vld [vmem:[%s868 + $0x49] sm:$0xff]
      %v1020 = vld [vmem:[%s868 + $0x61] sm:$0xff]
      %v1021 = vld [vmem:[%s868 + $0x79] sm:$0xff]
      %v1022 = vld [vmem:[%s868 + $0x91] sm:$0xff]
      %v1023 = vld [vmem:[%s868 + $0xa9] sm:$0xff]
      %s1024 = scalar_lea.vmem %s254, 8
      %v1025 = vld [vmem:[%s1024] sm:$0xf]
      %v1027 = vsel %vm429, %v1016, 0
      %v1030 = vsel %vm429, %v1017, 0
      %v1033 = vsel %vm429, %v1018, 0
      %v1036 = vsel %vm429, %v1019, 0
      %v1039 = vsel %vm429, %v1020, 0
      %v1042 = vsel %vm429, %v1021, 0
      %v1045 = vsel %vm429, %v1022, 0
      %v1048 = vsel %vm429, %v1023, 0
      %v1051 = vsel %vm454, %v1025, 0
      %1053 = vmatprep.subr.mxu0 0.0
      %1054 = vmatpush1.msra.mxu0 %v1051
      %1055 = vmatprep.subr.mxu0 0.0
      %1056 = vmatpush1.msra.mxu0 0.0
      %1057 = vmatprep.subr.mxu0 0.0
      %1058 = vmatpush1.msra.mxu0 0.0
      %1059 = vmatprep.subr.mxu0 0.0
      %1060 = vmatpush1.msra.mxu0 0.0
      %1061 = vmatprep.subr.mxu0 0.0
      %1062 = vmatpush1.msra.mxu0 0.0
      %1063 = vmatprep.subr.mxu0 0.0
      %1064 = vmatpush1.msra.mxu0 0.0
      %1065 = vmatprep.subr.mxu0 0.0
      %1066 = vmatpush1.msra.mxu0 0.0
      %1067 = vmatprep.subr.mxu0 0.0
      %1068 = vmatpush1.msra.mxu0 0.0
      %1069 = vmatprep.subr.mxu0 0.0
      %1070 = vmatpush1.msra.mxu0 0.0
      %1071 = vmatprep.subr.mxu0 0.0
      %1072 = vmatpush1.msra.mxu0 0.0
      %1073 = vmatprep.subr.mxu0 0.0
      %1074 = vmatpush1.msra.mxu0 0.0
      %1075 = vmatprep.subr.mxu0 0.0
      %1076 = vmatpush1.msra.mxu0 0.0
      %1077 = vmatprep.subr.mxu0 0.0
      %1078 = vmatpush1.msra.mxu0 0.0
      %1079 = vmatprep.subr.mxu0 0.0
      %1080 = vmatpush1.msra.mxu0 0.0
      %1081 = vmatprep.subr.mxu0 0.0
      %1082 = vmatpush1.msra.mxu0 0.0
      %1083 = vmatprep.subr.mxu0 0.0
      %1084 = vmatpush1.msra.mxu0 0.0
      %1085 = vmatprep.subr.mxu0 0.0
      %1086 = vmatpush1.msra.mxu0 0.0
      %1087 = vmatprep.subr.mxu0 0.0
      %1088 = vmatpush1.msra.mxu0 0.0
      %1089 = vmatprep.subr.mxu0 0.0
      %1090 = vmatpush1.msra.mxu0 0.0
      %1091 = vmatprep.subr.mxu0 0.0
      %1092 = vmatpush1.msra.mxu0 0.0
      %1093 = vmatprep.subr.mxu0 0.0
      %1094 = vmatpush1.msra.mxu0 0.0
      %1095 = vmatprep.subr.mxu0 0.0
      %1096 = vmatpush1.msra.mxu0 0.0
      %1097 = vmatprep.subr.mxu0 0.0
      %1098 = vmatpush1.msra.mxu0 0.0
      %1099 = vmatprep.subr.mxu0 0.0
      %1100 = vmatpush1.msra.mxu0 0.0
      %1101 = vmatprep.subr.mxu0 0.0
      %1102 = vmatpush1.msra.mxu0 0.0
      %1103 = vmatprep.subr.mxu0 0.0
      %1104 = vmatpush1.msra.mxu0 0.0
      %1105 = vmatprep.subr.mxu0 0.0
      %1106 = vmatpush1.msra.mxu0 0.0
      %1107 = vmatprep.subr.mxu0 0.0
      %1108 = vmatpush1.msra.mxu0 0.0
      %1109 = vmatprep.subr.mxu0 0.0
      %1110 = vmatpush1.msra.mxu0 0.0
      %1111 = vmatprep.subr.mxu0 0.0
      %1112 = vmatpush1.msra.mxu0 0.0
      %1113 = vmatprep.subr.mxu0 0.0
      %1114 = vmatpush1.msra.mxu0 0.0
      %1115 = vmatprep.subr.mxu0 0.0
      %1116 = vmatpush1.msra.mxu0 0.0
      %1117 = vmatprep.mubr.f32.mxu0 0.0
      %1118 = vmatmul.mubr.f32.gmra.mrb[0].mxu0 %v1027
      %v1119 = vpop.f32.mrb[0].mxu0
      %v1120 = vadd.f32 0.0, %v1119
      %v1121 = vpop.f32.mrb[0].mxu0
      %1122 = vmatprep.mubr.f32.mxu0 0.0
      %1123 = vmatmul.mubr.f32.gmra.mrb[0].mxu0 %v1030
      %v1124 = vpop.f32.mrb[0].mxu0
      %v1125 = vadd.f32 0.0, %v1124
      %v1126 = vpop.f32.mrb[0].mxu0
      %1127 = vmatprep.mubr.f32.mxu0 0.0
      %1128 = vmatmul.mubr.f32.gmra.mrb[0].mxu0 %v1033
      %v1129 = vpop.f32.mrb[0].mxu0
      %v1130 = vadd.f32 0.0, %v1129
      %v1131 = vpop.f32.mrb[0].mxu0
      %1132 = vmatprep.mubr.f32.mxu0 0.0
      %1133 = vmatmul.mubr.f32.gmra.mrb[0].mxu0 %v1036
      %v1134 = vpop.f32.mrb[0].mxu0
      %v1135 = vadd.f32 0.0, %v1134
      %v1136 = vpop.f32.mrb[0].mxu0
      %1137 = vmatprep.mubr.f32.mxu0 0.0
      %1138 = vmatmul.mubr.f32.gmra.mrb[0].mxu0 %v1039
      %v1139 = vpop.f32.mrb[0].mxu0
      %v1140 = vadd.f32 0.0, %v1139
      %v1141 = vpop.f32.mrb[0].mxu0
      %1142 = vmatprep.mubr.f32.mxu0 0.0
      %1143 = vmatmul.mubr.f32.gmra.mrb[0].mxu0 %v1042
      %v1144 = vpop.f32.mrb[0].mxu0
      %v1145 = vadd.f32 0.0, %v1144
      %v1146 = vpop.f32.mrb[0].mxu0
      %1147 = vmatprep.mubr.f32.mxu0 0.0
      %1148 = vmatmul.mubr.f32.gmra.mrb[0].mxu0 %v1045
      %v1149 = vpop.f32.mrb[0].mxu0
      %v1150 = vadd.f32 0.0, %v1149
      %v1151 = vpop.f32.mrb[0].mxu0
      %1152 = vmatprep.mubr.f32.mxu0 0.0
      %1153 = vmatmul.mubr.f32.gmra.mrb[0].mxu0 %v1048
      %v1154 = vpop.f32.mrb[0].mxu0
      %v1155 = vadd.f32 0.0, %v1154
      %v1156 = vpop.f32.mrb[0].mxu0
      %1157 = vdwg.mxu0
      %v1158 = vadd.f32 %v1008, %v1120
      %v1159 = vadd.f32 %v1009, %v1125
      %v1160 = vadd.f32 %v1010, %v1130
      %v1161 = vadd.f32 %v1011, %v1135
      %v1162 = vadd.f32 %v1012, %v1140
      %v1163 = vadd.f32 %v1013, %v1145
      %v1164 = vadd.f32 %v1014, %v1150
      %v1165 = vadd.f32 %v1015, %v1155
      %1166 = vst.msk [vmem:[%s265] sm:$0xff] %vm429, %v1158
      %1167 = vst.msk [vmem:[%s265 + $0x8] sm:$0xff] %vm429, %v1159
      %1168 = vst.msk [vmem:[%s265 + $0x10] sm:$0xff] %vm429, %v1160
      %1169 = vst.msk [vmem:[%s265 + $0x18] sm:$0xff] %vm429, %v1161
      %1170 = vst.msk [vmem:[%s265 + $0x20] sm:$0xff] %vm429, %v1162
      %1171 = vst.msk [vmem:[%s265 + $0x28] sm:$0xff] %vm429, %v1163
      %1172 = vst.msk [vmem:[%s265 + $0x30] sm:$0xff] %vm429, %v1164
      %1173 = vst.msk [vmem:[%s265 + $0x38] sm:$0xff] %vm429, %v1165
      %p1174 = scmp.lt.s32.totalorder %s19, 1
      %s1175 = scalar_select %p1174, %s19, 1
      %p1176 = scmp.lt.s32.totalorder %s20, 0
      %s1177 = scalar_select %p1176, %s20, 0
      %s1178 = smul.addr %s1175, 8
      %s1179 = sadd.s32 %s1177, %s1178
      %s1180 = smul.addr %s1179, 8
      %s1181 = scalar_lea.vmem %s4, %s1180
      // Predicated region
      $region37: #{tpu_custom_call.1} parent=35 // pred_check
        %p1182 = pneg %p151
      $region38: #{tpu_custom_call.1} parent=35 // pred_check_branch
        %1184 = sbr.rel (%p1182) target = $region40
      $region39: #{tpu_custom_call.1} parent=35 // pred_region
        _
      $region40: #{tpu_custom_call.1} parent=35 // pred_fallthru
        _
    $region36: #{tpu_custom_call.1} parent=5 // pred_fallthru
      _
    %p1185 = scmp.le.s32.totalorder 2, %s10
    // Predicated region
    $region41: #{tpu_custom_call.1} parent=5 // pred_check
      %p1186 = pneg %p1185
    $region42: #{tpu_custom_call.1} parent=5 // pred_check_branch
      %1188 = sbr.rel (%p1186) target = $region44
    $region43: #{tpu_custom_call.1} parent=5 // pred_region
      %s1189 = ssub.s32 %s10, 2
      // Predicated region
      $region45: #{tpu_custom_call.1} parent=43 // pred_check
        %p1190 = pneg %p157
      $region46: #{tpu_custom_call.1} parent=43 // pred_check_branch
        %1192 = sbr.rel (%p1190) target = $region48
      $region47: #{tpu_custom_call.1} parent=43 // pred_region
        %p1193 = scmp.lt.s32.totalorder %s21, 1
        %s1194 = scalar_select %p1193, %s21, 1
        %p1195 = scmp.lt.s32.totalorder %s22, 0
        %s1196 = scalar_select %p1195, %s22, 0
        %s1197 = smul.addr %s1194, 8
        %s1198 = sadd.s32 %s1196, %s1197
        %s1199 = smul.addr %s1198, 8
        %s1200 = scalar_lea.vmem %s4, %s1199
      $region48: #{tpu_custom_call.1} parent=43 // pred_fallthru
        _
    $region44: #{tpu_custom_call.1} parent=5 // pred_fallthru
      _
  $region6: #{tpu_custom_call.1} parent=0 // loop_footer
    %s14 = sadd.s32 1, %s10
  $region7: #{tpu_custom_call.1} parent=0 // loop_footer_branch
    %9 = sbr.rel target = $region3
  $region8: #{tpu_custom_call.1} parent=0 // loop_exit
    _

</llo_original>
